<compile_context>
chip_gen: v7x
topology: tpu7x:2x2x1
jax: 0.10.0
libtpu: 0.0.40
codegen_flags: <defaults>
</compile_context>

<pallas_src>
import functools

import jax
import jax.numpy as jnp
from jax.experimental import pallas as pl
from jax.experimental.pallas import tpu as pltpu

LN_EPS = 1e-5  # PyTorch nn.LayerNorm default


def _round_up(a, b):
  return ((a + b - 1) // b) * b


def _tpu_defaults():
  """Per-generation VMEM budget and requested row tile."""
  kind = ""
  try:
    kind = jax.devices()[0].device_kind.lower()
  except Exception:
    pass
  vmem_cap = None
  try:
    vmem_cap = int(pltpu.get_tpu_info().vmem_capacity_bytes)
  except Exception:
    vmem_cap = None
  if not vmem_cap or vmem_cap <= 0:
    # v5e / v6e: 128 MiB VMEM; v7x: 64 MiB per TensorCore.  Unknown -> assume
    # the conservative v7x number.
    vmem_cap = 128 * 1024 * 1024 if ("v5" in kind or "v6" in kind) else 64 * 1024 * 1024
  # Leave ~20% headroom for Mosaic internal scratch / pipeline bookkeeping
  # (critical on v7x where 64 MiB is the entire physical VMEM per TC).
  budget = int(vmem_cap * 0.8)
  if "v5" in kind:
    tm_req = 256        # v5e: 128-wide MXU, ~820 GB/s HBM -> 128/256-row tiles
  elif vmem_cap >= 96 * 1024 * 1024:
    tm_req = 512        # v6e-class: big tiles amortize per-grid-step overhead
  else:
    tm_req = 256        # v7x-class: bounded by 64 MiB/TC
  return budget, tm_req


def _fits(tm, th, d, x_bytes, w_bytes, budget):
  io = 2 * 2 * tm * d * x_bytes              # double-buffered x + out tiles
  scratch = tm * d * (w_bytes + 4)           # xn scratch + f32 accumulator
  wtiles = 2 * (2 * d * th + th) * w_bytes   # double-buffered W1/W2/b1 tiles
  small = 4 * 3 * d * 4                      # gamma/beta/b2 (tiny, generous)
  temps = 12 * tm * th                       # f32 h + exp + cast copies
  return io + scratch + wtiles + small + temps <= budget


def _choose_tiles(n, d, h, x_bytes, w_bytes, budget, tm_req):
  """Largest MXU-aligned row tile (>=16 for bf16 packing), then largest
  128-aligned hidden tile, that fit the per-generation VMEM budget."""
  n16 = max(16, _round_up(n, 16))
  tm_cands, seen = [], set()
  for c in (1024, 512, 256, 128, 64, 32, 16):
    if c > max(16, tm_req):
      continue
    c = max(16, min(c, n16))
    if c not in seen:
      seen.add(c)
      tm_cands.append(c)
  if h <= 256:
    th_cands = [h]                           # block == full dim, no padding
  else:
    th_cands = [c for c in (2048, 1024, 512, 256, 128)
                if c <= _round_up(h, 128)]
  for tm in tm_cands:        # prefer large row tiles (weights re-stream per i)
    for th in th_cands:      # then the largest hidden tile that still fits
      if _fits(tm, th, d, x_bytes, w_bytes, budget):
        return tm, th
  return tm_cands[-1], th_cands[-1]


def _mlp_kernel(x_ref, gamma_ref, beta_ref, w1_ref, b1_ref, w2_ref, b2_ref,
                o_ref, xn_ref, acc_ref, *, approx_sigmoid):
  """Grid (rows, hidden-tiles): rows are parallel, hidden axis is a reduction."""
  k = pl.program_id(1)

  @pl.when(k == 0)
  def _():
    # LayerNorm in f32 (two-pass variance, matching nn.LayerNorm numerics).
    # Store the normalized tile once in the matmul compute dtype and reuse it
    # across every hidden-dim step; zero the f32 accumulator.
    x = x_ref[...].astype(jnp.float32)
    mean = jnp.mean(x, axis=-1, keepdims=True)
    xc = x - mean
    var = jnp.mean(xc * xc, axis=-1, keepdims=True)
    xn = xc * jax.lax.rsqrt(var + LN_EPS)
    xn = xn * gamma_ref[...].astype(jnp.float32) + beta_ref[...].astype(jnp.float32)
    xn_ref[...] = xn.astype(xn_ref.dtype)
    acc_ref[...] = jnp.zeros_like(acc_ref)

  # First linear, this hidden tile: (tm, D) @ (D, th) on the MXU, f32 acc.
  h = jnp.dot(xn_ref[...], w1_ref[...], preferred_element_type=jnp.float32)
  h = h + b1_ref[...].astype(jnp.float32)
  # Swish: h * sigmoid(h) = h / (1 + exp(-h)); exp (+ approx recip) go to EUP.
  h = h * pl.reciprocal(1.0 + jnp.exp(-h), approx=approx_sigmoid)
  # (Dropout = identity in eval mode.)
  # Second linear, accumulated over hidden tiles: (tm, th) @ (th, D).
  acc_ref[...] += jnp.dot(h.astype(w2_ref.dtype), w2_ref[...],
                          preferred_element_type=jnp.float32)

  @pl.when(k == pl.num_programs(1) - 1)
  def _():
    # Residual: re-read the (still resident, k-invariant) input tile here
    # instead of keeping an f32 copy live across both matmuls.
    y = acc_ref[...] + b2_ref[...].astype(jnp.float32)
    o_ref[...] = (x_ref[...].astype(jnp.float32) + y).astype(o_ref.dtype)


@functools.partial(
    jax.jit,
    static_argnames=("tm", "th", "approx_sigmoid", "vmem_limit_bytes"))
def _mlp_forward_2d(x2, gamma, beta, w1, b1, w2, b2, *, tm, th,
                    approx_sigmoid, vmem_limit_bytes):
  N, D = x2.shape        # N pre-padded to a multiple of tm
  H = w1.shape[1]        # H pre-padded to a multiple of th
  ni, nk = N // tm, H // th

  kernel = functools.partial(_mlp_kernel, approx_sigmoid=approx_sigmoid)

  cost = pl.CostEstimate(
      flops=4 * N * D * H + 12 * N * D,
      transcendentals=N * H,
      bytes_accessed=(2 * N * D * x2.dtype.itemsize
                      + ni * (2 * D * H + H + 3 * D) * w1.dtype.itemsize),
  )

  return pl.pallas_call(
      kernel,
      out_shape=jax.ShapeDtypeStruct((N, D), x2.dtype),
      grid_spec=pltpu.PrefetchScalarGridSpec(
          num_scalar_prefetch=0,
          grid=(ni, nk),
          in_specs=[
              pl.BlockSpec((tm, D), lambda i, k: (i, 0)),   # x rows (k-invariant)
              pl.BlockSpec((1, D), lambda i, k: (0, 0)),    # LN gamma
              pl.BlockSpec((1, D), lambda i, k: (0, 0)),    # LN beta
              pl.BlockSpec((D, th), lambda i, k: (0, k)),   # W1 column tile
              pl.BlockSpec((1, th), lambda i, k: (0, k)),   # b1 tile
              pl.BlockSpec((th, D), lambda i, k: (k, 0)),   # W2 row tile
              pl.BlockSpec((1, D), lambda i, k: (0, 0)),    # b2
          ],
          out_specs=pl.BlockSpec((tm, D), lambda i, k: (i, 0)),
          scratch_shapes=[
              pltpu.VMEM((tm, D), w1.dtype),      # LayerNorm output, reused over k
              pltpu.VMEM((tm, D), jnp.float32),   # f32 accumulator
          ]),
      compiler_params=pltpu.CompilerParams(
          dimension_semantics=("parallel", "arbitrary"),
          vmem_limit_bytes=vmem_limit_bytes),
      cost_estimate=cost,
  )(x2, gamma, beta, w1, b1, w2, b2)


def mlp_forward(x, gamma, beta, w1, b1, w2, b2, *, tm=None, th=None,
                vmem_budget_bytes=None):
  """x: (B, T, D). Params follow PyTorch shapes but weights are pre-transposed
  to (in, out) so the kernel does x @ W directly on the MXU."""
  B, T, D = x.shape
  H = w1.shape[1]
  N = B * T

  budget_default, tm_req_default = _tpu_defaults()
  budget = int(vmem_budget_bytes) if vmem_budget_bytes is not None else budget_default
  tm_req = tm if tm is not None else tm_req_default

  x_bytes = x.dtype.itemsize
  w_bytes = w1.dtype.itemsize
  tm_sel, th_sel = _choose_tiles(N, D, H, x_bytes, w_bytes, budget, tm_req)
  if th is not None:
    th_sel = th

  x2 = x.reshape(N, D)
  # Pad rows / hidden dim to tile multiples (zero padding is exact: padded W1
  # columns give h=0 -> swish(0)=0, and padded W2 rows contribute 0).
  Np = _round_up(N, tm_sel)
  if Np != N:
    x2 = jnp.pad(x2, ((0, Np - N), (0, 0)))
  Hp = _round_up(H, th_sel)
  if Hp != H:
    w1 = jnp.pad(w1, ((0, 0), (0, Hp - H)))
    b1 = jnp.pad(b1, ((0, 0), (0, Hp - H)))
    w2 = jnp.pad(w2, ((0, Hp - H), (0, 0)))

  # Approx (EUP) reciprocal for the bf16/quantized path; exact on f32.
  approx_sigmoid = bool(w1.dtype != jnp.float32)

  out2 = _mlp_forward_2d(x2, gamma, beta, w1, b1, w2, b2,
                         tm=int(tm_sel), th=int(th_sel),
                         approx_sigmoid=approx_sigmoid,
                         vmem_limit_bytes=int(budget))
  if Np != N:
    out2 = out2[:N]
  return out2.reshape(B, T, D)


def init_params(key, dim_in, hidden, dtype=jnp.float32):
  """Deterministic synthetic parameters mirroring the PyTorch module shapes.
  PyTorch Linear stores weight as (out, in); we store the transposed (in, out)
  form so the kernel can do x @ W directly."""
  k1, k2, k3, k4 = jax.random.split(key, 4)
  gamma = jnp.ones((1, dim_in), dtype)                   # LayerNorm weight
  beta = jnp.zeros((1, dim_in), dtype)                   # LayerNorm bias
  s1 = 1.0 / jnp.sqrt(dim_in)
  s2 = 1.0 / jnp.sqrt(hidden)
  w1 = jax.random.uniform(k1, (dim_in, hidden), dtype, -s1, s1)
  b1 = jax.random.uniform(k2, (1, hidden), dtype, -s1, s1)
  w2 = jax.random.uniform(k3, (hidden, dim_in), dtype, -s2, s2)
  b2 = jax.random.uniform(k4, (1, dim_in), dtype, -s2, s2)
  return gamma, beta, w1, b1, w2, b2


def _reference(x, gamma, beta, w1, b1, w2, b2):
  """Pure-JAX reference mirroring the PyTorch forward (eval mode)."""
  xf = x.astype(jnp.float32)
  mean = jnp.mean(xf, axis=-1, keepdims=True)
  var = jnp.mean((xf - mean) ** 2, axis=-1, keepdims=True)
  xn = (xf - mean) / jnp.sqrt(var + LN_EPS)
  xn = xn * gamma[0] + beta[0]
  h = xn @ w1 + b1[0]
  h = h * jax.nn.sigmoid(h)
  y = h @ w2 + b2[0]
  return (xf + y).astype(x.dtype)


if __name__ == "__main__":
  key = jax.random.PRNGKey(0)
  kx, kp, kx2, kp2 = jax.random.split(key, 4)

  # Small f32 case (single hidden tile).
  B, T, D, H = 2, 8, 32, 64
  x = jax.random.normal(kx, (B, T, D), jnp.float32)
  params = init_params(kp, D, H)
  out = jax.block_until_ready(mlp_forward(x, *params))
  ref = _reference(x, *params)
  assert out.shape == (B, T, D)
  assert jnp.allclose(out, ref, atol=1e-4, rtol=1e-4), (
      "Pallas f32 output mismatch vs reference")

  # f32 case exercising the hidden-dim reduction axis (th=128 -> 3 k-steps)
  # and the ragged row-tile padding path.
  B2, T2, D2, H2 = 2, 100, 128, 384
  x2 = jax.random.normal(kx2, (B2, T2, D2), jnp.float32)
  params2 = init_params(kp2, D2, H2)
  out2 = jax.block_until_ready(mlp_forward(x2, *params2, th=128))
  ref2 = _reference(x2, *params2)
  assert out2.shape == (B2, T2, D2)
  assert jnp.allclose(out2, ref2, atol=2e-4, rtol=2e-4), (
      "Pallas f32 (hidden-tiled) output mismatch vs reference")

  # bf16 path: bf16 operands hit the full-rate MXU with f32 accumulation and
  # the EUP approx reciprocal; compare loosely against the f32-computed ref.
  xb = x.astype(jnp.bfloat16)
  pb = tuple(p.astype(jnp.bfloat16) for p in params)
  outb = jax.block_until_ready(mlp_forward(xb, *pb))
  refb = _reference(xb, *pb)
  assert jnp.allclose(outb.astype(jnp.float32), refb.astype(jnp.float32),
                      atol=5e-2, rtol=5e-2), (
      "Pallas bf16 output mismatch vs reference")

  print("KERNEL_OK")
</pallas_src>

<mosaic_0001>
module attributes {stable_mosaic.version = 11 : i64} {
  func.func @_mlp_kernel(%arg0: i32, %arg1: i32, %arg2: memref<16x32xf32, #tpu.memory_space<vmem>>, %arg3: memref<1x32xf32, #tpu.memory_space<vmem>>, %arg4: memref<1x32xf32, #tpu.memory_space<vmem>>, %arg5: memref<32x64xf32, #tpu.memory_space<vmem>>, %arg6: memref<1x64xf32, #tpu.memory_space<vmem>>, %arg7: memref<64x32xf32, #tpu.memory_space<vmem>>, %arg8: memref<1x32xf32, #tpu.memory_space<vmem>>, %arg9: memref<16x32xf32, #tpu.memory_space<vmem>>, %arg10: memref<16x32xf32, #tpu.memory_space<vmem>>, %arg11: memref<16x32xf32, #tpu.memory_space<vmem>>) attributes {dimension_semantics = [#tpu.dimension_semantics<parallel>, #tpu.dimension_semantics<arbitrary>], iteration_bounds = array<i64: 1, 1>, scalar_prefetch = 0 : i64, scratch_operands = 2 : i64, tpu.core_type = #tpu.core_type<tc>, window_params = [{transform_indices = @transform_0, window_bounds = array<i64: 16, 32>}, {pipeline_mode = #tpu.pipeline_mode<synchronous>, transform_indices = @transform_1, window_bounds = array<i64: 1, 32>}, {pipeline_mode = #tpu.pipeline_mode<synchronous>, transform_indices = @transform_2, window_bounds = array<i64: 1, 32>}, {transform_indices = @transform_3, window_bounds = array<i64: 32, 64>}, {transform_indices = @transform_4, window_bounds = array<i64: 1, 64>}, {transform_indices = @transform_5, window_bounds = array<i64: 64, 32>}, {pipeline_mode = #tpu.pipeline_mode<synchronous>, transform_indices = @transform_6, window_bounds = array<i64: 1, 32>}, {transform_indices = @transform_7, window_bounds = array<i64: 16, 32>}]} {
    %c0_i32 = arith.constant 0 : i32
    %0 = arith.cmpi eq, %arg1, %c0_i32 : i32
    %1 = arith.extui %0 : i1 to i32
    %c0_i32_0 = arith.constant 0 : i32
    %2 = arith.cmpi ne, %1, %c0_i32_0 : i32
    scf.if %2 {
      %c0_17 = arith.constant 0 : index
      %c0_18 = arith.constant 0 : index
      %24 = vector.load %arg2[%c0_17, %c0_18] : memref<16x32xf32, #tpu.memory_space<vmem>>, vector<16x32xf32>
      %cst_19 = arith.constant dense<0.000000e+00> : vector<16xf32>
      %25 = vector.multi_reduction <add>, %24, %cst_19 [1] : vector<16x32xf32> to vector<16xf32>
      %26 = vector.shape_cast %25 : vector<16xf32> to vector<16x1xf32>
      %cst_20 = arith.constant 3.200000e+01 : f32
      %27 = vector.broadcast %cst_20 : f32 to vector<16x1xf32>
      %28 = arith.divf %26, %27 : vector<16x1xf32>
      %29 = vector.broadcast %28 : vector<16x1xf32> to vector<16x32xf32>
      %30 = arith.subf %24, %29 : vector<16x32xf32>
      %31 = arith.mulf %30, %30 : vector<16x32xf32>
      %cst_21 = arith.constant dense<0.000000e+00> : vector<16xf32>
      %32 = vector.multi_reduction <add>, %31, %cst_21 [1] : vector<16x32xf32> to vector<16xf32>
      %33 = vector.shape_cast %32 : vector<16xf32> to vector<16x1xf32>
      %cst_22 = arith.constant 3.200000e+01 : f32
      %34 = vector.broadcast %cst_22 : f32 to vector<16x1xf32>
      %35 = arith.divf %33, %34 : vector<16x1xf32>
      %cst_23 = arith.constant 9.99999974E-6 : f32
      %36 = vector.broadcast %cst_23 : f32 to vector<16x1xf32>
      %37 = arith.addf %35, %36 : vector<16x1xf32>
      %38 = math.rsqrt %37 : vector<16x1xf32>
      %39 = vector.broadcast %38 : vector<16x1xf32> to vector<16x32xf32>
      %40 = arith.mulf %30, %39 : vector<16x32xf32>
      %c0_24 = arith.constant 0 : index
      %c0_25 = arith.constant 0 : index
      %41 = vector.load %arg3[%c0_24, %c0_25] : memref<1x32xf32, #tpu.memory_space<vmem>>, vector<1x32xf32>
      %42 = vector.broadcast %41 : vector<1x32xf32> to vector<16x32xf32>
      %43 = arith.mulf %40, %42 : vector<16x32xf32>
      %c0_26 = arith.constant 0 : index
      %c0_27 = arith.constant 0 : index
      %44 = vector.load %arg4[%c0_26, %c0_27] : memref<1x32xf32, #tpu.memory_space<vmem>>, vector<1x32xf32>
      %45 = vector.broadcast %44 : vector<1x32xf32> to vector<16x32xf32>
      %46 = arith.addf %43, %45 : vector<16x32xf32>
      %c0_28 = arith.constant 0 : index
      %c0_29 = arith.constant 0 : index
      %47 = vector.load %arg10[%c0_28, %c0_29] : memref<16x32xf32, #tpu.memory_space<vmem>>, vector<16x32xf32>
      tpu.vector_store %arg10[%c0_28, %c0_29], %46 {strides = array<i32>} : memref<16x32xf32, #tpu.memory_space<vmem>>, vector<16x32xf32>,
      %cst_30 = arith.constant 0.000000e+00 : f32
      %48 = vector.broadcast %cst_30 : f32 to vector<16x32xf32>
      %c0_31 = arith.constant 0 : index
      %c0_32 = arith.constant 0 : index
      %49 = vector.load %arg11[%c0_31, %c0_32] : memref<16x32xf32, #tpu.memory_space<vmem>>, vector<16x32xf32>
      tpu.vector_store %arg11[%c0_31, %c0_32], %48 {strides = array<i32>} : memref<16x32xf32, #tpu.memory_space<vmem>>, vector<16x32xf32>,
    } else {
    }
    %c0 = arith.constant 0 : index
    %c0_1 = arith.constant 0 : index
    %3 = vector.load %arg10[%c0, %c0_1] : memref<16x32xf32, #tpu.memory_space<vmem>>, vector<16x32xf32>
    %c0_2 = arith.constant 0 : index
    %c0_3 = arith.constant 0 : index
    %4 = vector.load %arg5[%c0_2, %c0_3] : memref<32x64xf32, #tpu.memory_space<vmem>>, vector<32x64xf32>
    %cst = arith.constant dense<0.000000e+00> : vector<16x64xf32>
    %5 = tpu.matmul %3, %4, %cst {dimension_numbers = #tpu.dot_dimension_numbers<[1], [0], [0], [1], [0, 0, 1, 1], [], []>} : vector<16x32xf32>, vector<32x64xf32>, vector<16x64xf32> -> vector<16x64xf32>
    %c0_4 = arith.constant 0 : index
    %c0_5 = arith.constant 0 : index
    %6 = vector.load %arg6[%c0_4, %c0_5] : memref<1x64xf32, #tpu.memory_space<vmem>>, vector<1x64xf32>
    %7 = vector.broadcast %6 : vector<1x64xf32> to vector<16x64xf32>
    %8 = arith.addf %5, %7 : vector<16x64xf32>
    %cst_6 = arith.constant 0.000000e+00 : f32
    %9 = vector.broadcast %cst_6 : f32 to vector<16x64xf32>
    %10 = arith.subf %9, %8 : vector<16x64xf32>
    %11 = math.exp %10 : vector<16x64xf32>
    %cst_7 = arith.constant 1.000000e+00 : f32
    %12 = vector.broadcast %cst_7 : f32 to vector<16x64xf32>
    %13 = arith.addf %12, %11 : vector<16x64xf32>
    %14 = tpu.reciprocal %13 : vector<16x64xf32> -> vector<16x64xf32>
    %15 = arith.mulf %8, %14 : vector<16x64xf32>
    %c0_8 = arith.constant 0 : index
    %c0_9 = arith.constant 0 : index
    %16 = vector.load %arg11[%c0_8, %c0_9] : memref<16x32xf32, #tpu.memory_space<vmem>>, vector<16x32xf32>
    %c0_10 = arith.constant 0 : index
    %c0_11 = arith.constant 0 : index
    %17 = vector.load %arg7[%c0_10, %c0_11] : memref<64x32xf32, #tpu.memory_space<vmem>>, vector<64x32xf32>
    %cst_12 = arith.constant dense<0.000000e+00> : vector<16x32xf32>
    %18 = tpu.matmul %15, %17, %cst_12 {dimension_numbers = #tpu.dot_dimension_numbers<[1], [0], [0], [1], [0, 0, 1, 1], [], []>} : vector<16x64xf32>, vector<64x32xf32>, vector<16x32xf32> -> vector<16x32xf32>
    %19 = arith.addf %16, %18 : vector<16x32xf32>
    %c0_13 = arith.constant 0 : index
    %c0_14 = arith.constant 0 : index
    %20 = vector.load %arg11[%c0_13, %c0_14] : memref<16x32xf32, #tpu.memory_space<vmem>>, vector<16x32xf32>
    tpu.vector_store %arg11[%c0_13, %c0_14], %19 {strides = array<i32>} : memref<16x32xf32, #tpu.memory_space<vmem>>, vector<16x32xf32>,
    %c0_i32_15 = arith.constant 0 : i32
    %21 = arith.cmpi eq, %arg1, %c0_i32_15 : i32
    %22 = arith.extui %21 : i1 to i32
    %c0_i32_16 = arith.constant 0 : i32
    %23 = arith.cmpi ne, %22, %c0_i32_16 : i32
    scf.if %23 {
      %c0_17 = arith.constant 0 : index
      %c0_18 = arith.constant 0 : index
      %24 = vector.load %arg11[%c0_17, %c0_18] : memref<16x32xf32, #tpu.memory_space<vmem>>, vector<16x32xf32>
      %c0_19 = arith.constant 0 : index
      %c0_20 = arith.constant 0 : index
      %25 = vector.load %arg8[%c0_19, %c0_20] : memref<1x32xf32, #tpu.memory_space<vmem>>, vector<1x32xf32>
      %26 = vector.broadcast %25 : vector<1x32xf32> to vector<16x32xf32>
      %27 = arith.addf %24, %26 : vector<16x32xf32>
      %c0_21 = arith.constant 0 : index
      %c0_22 = arith.constant 0 : index
      %28 = vector.load %arg2[%c0_21, %c0_22] : memref<16x32xf32, #tpu.memory_space<vmem>>, vector<16x32xf32>
      %29 = arith.addf %28, %27 : vector<16x32xf32>
      %c0_23 = arith.constant 0 : index
      %c0_24 = arith.constant 0 : index
      %30 = vector.load %arg9[%c0_23, %c0_24] : memref<16x32xf32, #tpu.memory_space<vmem>>, vector<16x32xf32>
      tpu.vector_store %arg9[%c0_23, %c0_24], %29 {strides = array<i32>} : memref<16x32xf32, #tpu.memory_space<vmem>>, vector<16x32xf32>,
    } else {
    }
    return
  }
  func.func @transform_0(%arg0: i32, %arg1: i32) -> (i32, i32) {
    %c0_i32 = arith.constant 0 : i32
    %c0_i32_0 = arith.constant 0 : i32
    return %arg0, %c0_i32 : i32, i32
  }
  func.func @transform_1(%arg0: i32, %arg1: i32) -> (i32, i32) {
    %c0_i32 = arith.constant 0 : i32
    %c0_i32_0 = arith.constant 0 : i32
    %c0_i32_1 = arith.constant 0 : i32
    return %c0_i32, %c0_i32_0 : i32, i32
  }
  func.func @transform_2(%arg0: i32, %arg1: i32) -> (i32, i32) {
    %c0_i32 = arith.constant 0 : i32
    %c0_i32_0 = arith.constant 0 : i32
    %c0_i32_1 = arith.constant 0 : i32
    return %c0_i32, %c0_i32_0 : i32, i32
  }
  func.func @transform_3(%arg0: i32, %arg1: i32) -> (i32, i32) {
    %c0_i32 = arith.constant 0 : i32
    %c0_i32_0 = arith.constant 0 : i32
    return %c0_i32, %arg1 : i32, i32
  }
  func.func @transform_4(%arg0: i32, %arg1: i32) -> (i32, i32) {
    %c0_i32 = arith.constant 0 : i32
    %c0_i32_0 = arith.constant 0 : i32
    return %c0_i32, %arg1 : i32, i32
  }
  func.func @transform_5(%arg0: i32, %arg1: i32) -> (i32, i32) {
    %c0_i32 = arith.constant 0 : i32
    %c0_i32_0 = arith.constant 0 : i32
    return %arg1, %c0_i32 : i32, i32
  }
  func.func @transform_6(%arg0: i32, %arg1: i32) -> (i32, i32) {
    %c0_i32 = arith.constant 0 : i32
    %c0_i32_0 = arith.constant 0 : i32
    %c0_i32_1 = arith.constant 0 : i32
    return %c0_i32, %c0_i32_0 : i32, i32
  }
  func.func @transform_7(%arg0: i32, %arg1: i32) -> (i32, i32) {
    %c0_i32 = arith.constant 0 : i32
    %c0_i32_0 = arith.constant 0 : i32
    return %arg0, %c0_i32 : i32, i32
  }
}

</mosaic_0001>

<llo_original>
// kernel: _mlp_forward_2d.1
$region0: #{_mlp_forward_2d.1}
  #allocation0 [shape = 'u32[]', space=smem, size = 0x4, offset = 0x4, fixed_abs, tag = 'smem constant byte address 0x4 - core index']
  #allocation1 [shape = 'u32[144,128]{1,0:T(1,128)}', space=vmem, size = 0x12000, scoped, tag = 'internal scratch']
  #allocation2 [shape = 'f32[16,32]{1,0:T(8,128)}', space=vmem, size = 0x2000, scoped, tag = 'scratch operand']
  #allocation3 [shape = 'f32[16,32]{1,0:T(8,128)}', space=vmem, size = 0x2000, scoped, tag = 'scratch operand']
  %s0 = inlined_call_operand.vmem [shape: f32[16,32], index: 0, kind: input, shape index: {}]
  %s1 = inlined_call_operand.vmem [shape: f32[1,32], index: 1, kind: input, shape index: {}]
  %s2 = inlined_call_operand.vmem [shape: f32[1,32], index: 2, kind: input, shape index: {}]
  %s3 = inlined_call_operand.vmem [shape: f32[32,64], index: 3, kind: input, shape index: {}]
  %s4 = inlined_call_operand.vmem [shape: f32[1,64], index: 4, kind: input, shape index: {}]
  %s5 = inlined_call_operand.vmem [shape: f32[64,32], index: 5, kind: input, shape index: {}]
  %s6 = inlined_call_operand.vmem [shape: f32[1,32], index: 6, kind: input, shape index: {}]
  %s7 = inlined_call_operand.hbm [shape: f32[16,32], index: 7, kind: output, shape index: {}]
  %s8 = sld [smem:[#allocation0]]
  $region46: #{_mlp_forward_2d.1} parent=0
    _
  %s10 = ssub.s32 1, %s8
  %s11 = scalar_select 0, %s10, %s8
  $region1: #{_mlp_forward_2d.1} parent=0
    #allocation4 [shape = 'u8[8192]{0}', space=vmem, size = 0x2000, scoped, tag = 'output window, operand 0, single buffered']
    #allocation5 [shape = 's32[1]{0}', space=sflag, size = 0x4, scoped, tag = 'scoped memory for _mlp_forward_2d.1']
    %12 = vsyncpa [#allocation5], 0
    // Predicated region
    $region2: #{_mlp_forward_2d.1} parent=1 // pred_check
      _
    $region3: #{_mlp_forward_2d.1} parent=1 // pred_check_branch
      %14 = sbr.rel (0) target = $region5
    $region4: #{_mlp_forward_2d.1} parent=1 // pred_region
      _
    $region5: #{_mlp_forward_2d.1} parent=1 // pred_fallthru
      _
    // Predicated region
    $region6: #{_mlp_forward_2d.1} parent=1 // pred_check
      _
    $region7: #{_mlp_forward_2d.1} parent=1 // pred_check_branch
      %16 = sbr.rel (0) target = $region9
    $region8: #{_mlp_forward_2d.1} parent=1 // pred_region
      _
    $region9: #{_mlp_forward_2d.1} parent=1 // pred_fallthru
      _
    // Predicated region
    $region10: #{_mlp_forward_2d.1} parent=1 // pred_check
      _
    $region11: #{_mlp_forward_2d.1} parent=1 // pred_check_branch
      %18 = sbr.rel (0) target = $region13
    $region12: #{_mlp_forward_2d.1} parent=1 // pred_region
      _
    $region13: #{_mlp_forward_2d.1} parent=1 // pred_fallthru
      _
    // Predicated region
    $region14: #{_mlp_forward_2d.1} parent=1 // pred_check
      _
    $region15: #{_mlp_forward_2d.1} parent=1 // pred_check_branch
      %20 = sbr.rel (0) target = $region17
    $region16: #{_mlp_forward_2d.1} parent=1 // pred_region
      _
    $region17: #{_mlp_forward_2d.1} parent=1 // pred_fallthru
      _
    // Predicated region
    $region18: #{_mlp_forward_2d.1} parent=1 // pred_check
      _
    $region19: #{_mlp_forward_2d.1} parent=1 // pred_check_branch
      %22 = sbr.rel (0) target = $region21
    $region20: #{_mlp_forward_2d.1} parent=1 // pred_region
      _
    $region21: #{_mlp_forward_2d.1} parent=1 // pred_fallthru
      _
    // Predicated region
    $region22: #{_mlp_forward_2d.1} parent=1 // pred_check
      _
    $region23: #{_mlp_forward_2d.1} parent=1 // pred_check_branch
      %24 = sbr.rel (0) target = $region25
    $region24: #{_mlp_forward_2d.1} parent=1 // pred_region
      _
    $region25: #{_mlp_forward_2d.1} parent=1 // pred_fallthru
      _
    // Predicated region
    $region26: #{_mlp_forward_2d.1} parent=1 // pred_check
      _
    $region27: #{_mlp_forward_2d.1} parent=1 // pred_check_branch
      %26 = sbr.rel (0) target = $region29
    $region28: #{_mlp_forward_2d.1} parent=1 // pred_region
      _
    $region29: #{_mlp_forward_2d.1} parent=1 // pred_fallthru
      _
    %p27 = scmp.eq.s32.totalorder 0, 0
    // Predicated region
    $region30: #{_mlp_forward_2d.1} parent=1 // pred_check
      %p28 = pneg %p27
    $region31: #{_mlp_forward_2d.1} parent=1 // pred_check_branch
      %30 = sbr.rel (%p28) target = $region33
    $region32: #{_mlp_forward_2d.1} parent=1 // pred_region
      %v31 = vld [vmem:[%s0] sm:$0xff]
      %v32 = vld [vmem:[%s0 + $0x8] sm:$0xff]
      %vm33 = vcmask 261120
      %v34 = vsel %vm33, %v31, 0.0
      %35 = vadd.xlane.f32.xlu0 %v34
      %v36 = vpop.xlane.xlu0 %35
      %v37 = vsel %vm33, %v32, 0.0
      %38 = vadd.xlane.f32.xlu0 %v37
      %v39 = vpop.xlane.xlu0 %38
      %v40 = vrcp.pop 32.0
      %v41 = vmul.f32 %v36, %v40
      %v42 = vmul.f32 %v39, %v40
      %v43 = vsub.f32 %v31, %v41
      %v44 = vsub.f32 %v32, %v42
      %v45 = vmul.f32 %v43, %v43
      %v46 = vmul.f32 %v44, %v44
      %v47 = vsel %vm33, %v45, 0.0
      %48 = vadd.xlane.f32.xlu0 %v47
      %v49 = vpop.xlane.xlu0 %48
      %v50 = vsel %vm33, %v46, 0.0
      %51 = vadd.xlane.f32.xlu0 %v50
      %v52 = vpop.xlane.xlu0 %51
      %v53 = vmul.f32 %v49, %v40
      %v54 = vmul.f32 %v52, %v40
      %v55 = vadd.f32 %v53, 1e-05
      %v56 = vadd.f32 %v54, 1e-05
      %v57 = vrsqrt.pop %v55
      %v58 = vrsqrt.pop %v56
      %v59 = vmul.f32 %v43, %v57
      %v60 = vmul.f32 %v44, %v58
      %v61 = vld [vmem:[%s1] sm:$0x1]
      %v63 = vlaneseq
      %v64 = vshrl.u32 %v63, 7
      %v65 = vsub.s32 0, %v64
      %v66 = vrot.slane %v61, %v65
      %v68 = vmul.f32 %v59, %v66
      %v69 = vmul.f32 %v60, %v66
      %v70 = vld [vmem:[%s2] sm:$0x1]
      %v72 = vlaneseq
      %v73 = vshrl.u32 %v72, 7
      %v74 = vsub.s32 0, %v73
      %v75 = vrot.slane %v70, %v74
      %v77 = vadd.f32 %v68, %v75
      %v78 = vadd.f32 %v69, %v75
      %79 = vst.msk [vmem:[#allocation2] sm:$0xff] %vm33, %v77
      %80 = vst.msk [vmem:[#allocation2 + $0x8] sm:$0xff] %vm33, %v78
      %81 = vst.msk [vmem:[#allocation3] sm:$0xff] %vm33, 0.0
      %82 = vst.msk [vmem:[#allocation3 + $0x8] sm:$0xff] %vm33, 0.0
    $region33: #{_mlp_forward_2d.1} parent=1 // pred_fallthru
      _
    %v83 = vld [vmem:[#allocation2] sm:$0xff]
    %v84 = vld [vmem:[#allocation2 + $0x8] sm:$0xff]
    %v85 = vld [vmem:[%s3] sm:$0xff]
    %v86 = vld [vmem:[%s3 + $0x8] sm:$0xff]
    %v87 = vld [vmem:[%s3 + $0x10] sm:$0xff]
    %v88 = vld [vmem:[%s3 + $0x18] sm:$0xff]
    %v89 = vld [vmem:[%s4] sm:$0x1]
    %v91 = vlaneseq
    %v92 = vshrl.u32 %v91, 7
    %v93 = vsub.s32 0, %v92
    %v94 = vrot.slane %v89, %v93
    %vm96 = vcmask 261120
    %v98 = vsel %vm96, %v83, 0
    %v101 = vsel %vm96, %v84, 0
    %103 = vmatprep.subr.mxu0 0.0
    %104 = vmatpush1.msra.mxu0 %v85
    %105 = vmatprep.subr.mxu0 0.0
    %106 = vmatpush1.msra.mxu0 %v86
    %107 = vmatprep.subr.mxu0 0.0
    %108 = vmatpush1.msra.mxu0 %v87
    %109 = vmatprep.subr.mxu0 0.0
    %110 = vmatpush1.msra.mxu0 %v88
    %111 = vmatprep.subr.mxu0 0.0
    %112 = vmatpush1.msra.mxu0 0.0
    %113 = vmatprep.subr.mxu0 0.0
    %114 = vmatpush1.msra.mxu0 0.0
    %115 = vmatprep.subr.mxu0 0.0
    %116 = vmatpush1.msra.mxu0 0.0
    %117 = vmatprep.subr.mxu0 0.0
    %118 = vmatpush1.msra.mxu0 0.0
    %119 = vmatprep.subr.mxu0 0.0
    %120 = vmatpush1.msra.mxu0 0.0
    %121 = vmatprep.subr.mxu0 0.0
    %122 = vmatpush1.msra.mxu0 0.0
    %123 = vmatprep.subr.mxu0 0.0
    %124 = vmatpush1.msra.mxu0 0.0
    %125 = vmatprep.subr.mxu0 0.0
    %126 = vmatpush1.msra.mxu0 0.0
    %127 = vmatprep.subr.mxu0 0.0
    %128 = vmatpush1.msra.mxu0 0.0
    %129 = vmatprep.subr.mxu0 0.0
    %130 = vmatpush1.msra.mxu0 0.0
    %131 = vmatprep.subr.mxu0 0.0
    %132 = vmatpush1.msra.mxu0 0.0
    %133 = vmatprep.subr.mxu0 0.0
    %134 = vmatpush1.msra.mxu0 0.0
    %135 = vmatprep.subr.mxu0 0.0
    %136 = vmatpush1.msra.mxu0 0.0
    %137 = vmatprep.subr.mxu0 0.0
    %138 = vmatpush1.msra.mxu0 0.0
    %139 = vmatprep.subr.mxu0 0.0
    %140 = vmatpush1.msra.mxu0 0.0
    %141 = vmatprep.subr.mxu0 0.0
    %142 = vmatpush1.msra.mxu0 0.0
    %143 = vmatprep.subr.mxu0 0.0
    %144 = vmatpush1.msra.mxu0 0.0
    %145 = vmatprep.subr.mxu0 0.0
    %146 = vmatpush1.msra.mxu0 0.0
    %147 = vmatprep.subr.mxu0 0.0
    %148 = vmatpush1.msra.mxu0 0.0
    %149 = vmatprep.subr.mxu0 0.0
    %150 = vmatpush1.msra.mxu0 0.0
    %151 = vmatprep.subr.mxu0 0.0
    %152 = vmatpush1.msra.mxu0 0.0
    %153 = vmatprep.subr.mxu0 0.0
    %154 = vmatpush1.msra.mxu0 0.0
    %155 = vmatprep.subr.mxu0 0.0
    %156 = vmatpush1.msra.mxu0 0.0
    %157 = vmatprep.subr.mxu0 0.0
    %158 = vmatpush1.msra.mxu0 0.0
    %159 = vmatprep.subr.mxu0 0.0
    %160 = vmatpush1.msra.mxu0 0.0
    %161 = vmatprep.subr.mxu0 0.0
    %162 = vmatpush1.msra.mxu0 0.0
    %163 = vmatprep.subr.mxu0 0.0
    %164 = vmatpush1.msra.mxu0 0.0
    %165 = vmatprep.subr.mxu0 0.0
    %166 = vmatpush1.msra.mxu0 0.0
    %167 = vmatprep.mubr.f32.mxu0 0.0
    %168 = vmatmul.mubr.f32.gmra.mrb[0].mxu0 %v98
    %v169 = vpop.f32.mrb[0].mxu0
    %v170 = vadd.f32 %v94, %v169
    %v171 = vpop.f32.mrb[0].mxu0
    %172 = vmatprep.mubr.f32.mxu0 0.0
    %173 = vmatmul.mubr.f32.gmra.mrb[0].mxu0 %v101
    %v174 = vpop.f32.mrb[0].mxu0
    %v175 = vadd.f32 %v94, %v174
    %v176 = vpop.f32.mrb[0].mxu0
    %177 = vdwg.mxu0
    %v178 = vsub.f32 0.0, %v170
    %v179 = vsub.f32 0.0, %v175
    %v180 = vmul.f32 %v178, 1.442695
    %v181 = vpow.pop %v180
    %v182 = vmul.f32 %v179, 1.442695
    %v183 = vpow.pop %v182
    %v184 = vadd.f32 %v181, 1.0
    %v185 = vadd.f32 %v183, 1.0
    %v186 = vrcp.pop %v184
    %v187 = vrcp.pop %v185
    %v188 = vmul.f32 %v170, %v186
    %v189 = vmul.f32 %v175, %v187
    %v190 = vld [vmem:[#allocation3] sm:$0xff]
    %v191 = vld [vmem:[#allocation3 + $0x8] sm:$0xff]
    %v192 = vld [vmem:[%s5] sm:$0xff]
    %v193 = vld [vmem:[%s5 + $0x8] sm:$0xff]
    %v194 = vld [vmem:[%s5 + $0x10] sm:$0xff]
    %v195 = vld [vmem:[%s5 + $0x18] sm:$0xff]
    %v196 = vld [vmem:[%s5 + $0x20] sm:$0xff]
    %v197 = vld [vmem:[%s5 + $0x28] sm:$0xff]
    %v198 = vld [vmem:[%s5 + $0x30] sm:$0xff]
    %v199 = vld [vmem:[%s5 + $0x38] sm:$0xff]
    %vm200 = vcmask 523264
    %v202 = vsel %vm200, %v188, 0
    %v205 = vsel %vm200, %v189, 0
    %207 = vmatprep.subr.mxu0 0.0
    %208 = vmatpush1.msra.mxu0 %v192
    %209 = vmatprep.subr.mxu0 0.0
    %210 = vmatpush1.msra.mxu0 %v193
    %211 = vmatprep.subr.mxu0 0.0
    %212 = vmatpush1.msra.mxu0 %v194
    %213 = vmatprep.subr.mxu0 0.0
    %214 = vmatpush1.msra.mxu0 %v195
    %215 = vmatprep.subr.mxu0 0.0
    %216 = vmatpush1.msra.mxu0 %v196
    %217 = vmatprep.subr.mxu0 0.0
    %218 = vmatpush1.msra.mxu0 %v197
    %219 = vmatprep.subr.mxu0 0.0
    %220 = vmatpush1.msra.mxu0 %v198
    %221 = vmatprep.subr.mxu0 0.0
    %222 = vmatpush1.msra.mxu0 %v199
    %223 = vmatprep.subr.mxu0 0.0
    %224 = vmatpush1.msra.mxu0 0.0
    %225 = vmatprep.subr.mxu0 0.0
    %226 = vmatpush1.msra.mxu0 0.0
    %227 = vmatprep.subr.mxu0 0.0
    %228 = vmatpush1.msra.mxu0 0.0
    %229 = vmatprep.subr.mxu0 0.0
    %230 = vmatpush1.msra.mxu0 0.0
    %231 = vmatprep.subr.mxu0 0.0
    %232 = vmatpush1.msra.mxu0 0.0
    %233 = vmatprep.subr.mxu0 0.0
    %234 = vmatpush1.msra.mxu0 0.0
    %235 = vmatprep.subr.mxu0 0.0
    %236 = vmatpush1.msra.mxu0 0.0
    %237 = vmatprep.subr.mxu0 0.0
    %238 = vmatpush1.msra.mxu0 0.0
    %239 = vmatprep.subr.mxu0 0.0
    %240 = vmatpush1.msra.mxu0 0.0
    %241 = vmatprep.subr.mxu0 0.0
    %242 = vmatpush1.msra.mxu0 0.0
    %243 = vmatprep.subr.mxu0 0.0
    %244 = vmatpush1.msra.mxu0 0.0
    %245 = vmatprep.subr.mxu0 0.0
    %246 = vmatpush1.msra.mxu0 0.0
    %247 = vmatprep.subr.mxu0 0.0
    %248 = vmatpush1.msra.mxu0 0.0
    %249 = vmatprep.subr.mxu0 0.0
    %250 = vmatpush1.msra.mxu0 0.0
    %251 = vmatprep.subr.mxu0 0.0
    %252 = vmatpush1.msra.mxu0 0.0
    %253 = vmatprep.subr.mxu0 0.0
    %254 = vmatpush1.msra.mxu0 0.0
    %255 = vmatprep.subr.mxu0 0.0
    %256 = vmatpush1.msra.mxu0 0.0
    %257 = vmatprep.subr.mxu0 0.0
    %258 = vmatpush1.msra.mxu0 0.0
    %259 = vmatprep.subr.mxu0 0.0
    %260 = vmatpush1.msra.mxu0 0.0
    %261 = vmatprep.subr.mxu0 0.0
    %262 = vmatpush1.msra.mxu0 0.0
    %263 = vmatprep.subr.mxu0 0.0
    %264 = vmatpush1.msra.mxu0 0.0
    %265 = vmatprep.subr.mxu0 0.0
    %266 = vmatpush1.msra.mxu0 0.0
    %267 = vmatprep.subr.mxu0 0.0
    %268 = vmatpush1.msra.mxu0 0.0
    %269 = vmatprep.subr.mxu0 0.0
    %270 = vmatpush1.msra.mxu0 0.0
    %271 = vmatprep.mubr.f32.mxu0 0.0
    %272 = vmatmul.mubr.f32.gmra.mrb[0].mxu0 %v202
    %v273 = vpop.f32.mrb[0].mxu0
    %v274 = vadd.f32 0.0, %v273
    %v275 = vpop.f32.mrb[0].mxu0
    %276 = vmatprep.mubr.f32.mxu0 0.0
    %277 = vmatmul.mubr.f32.gmra.mrb[0].mxu0 %v205
    %v278 = vpop.f32.mrb[0].mxu0
    %v279 = vadd.f32 0.0, %v278
    %v280 = vpop.f32.mrb[0].mxu0
    %281 = vdwg.mxu0
    %v282 = vadd.f32 %v190, %v274
    %v283 = vadd.f32 %v191, %v279
    %284 = vst.msk [vmem:[#allocation3] sm:$0xff] %vm96, %v282
    %285 = vst.msk [vmem:[#allocation3 + $0x8] sm:$0xff] %vm96, %v283
    // Predicated region
    $region34: #{_mlp_forward_2d.1} parent=1 // pred_check
      %p286 = pneg %p27
    $region35: #{_mlp_forward_2d.1} parent=1 // pred_check_branch
      %288 = sbr.rel (%p286) target = $region37
    $region36: #{_mlp_forward_2d.1} parent=1 // pred_region
      %v289 = vld [vmem:[#allocation3] sm:$0xff]
      %v290 = vld [vmem:[#allocation3 + $0x8] sm:$0xff]
      %v291 = vld [vmem:[%s6] sm:$0x1]
      %v293 = vlaneseq
      %v294 = vshrl.u32 %v293, 7
      %v295 = vsub.s32 0, %v294
      %v296 = vrot.slane %v291, %v295
      %v298 = vadd.f32 %v289, %v296
      %v299 = vadd.f32 %v290, %v296
      %v300 = vld [vmem:[%s0] sm:$0xff]
      %v301 = vld [vmem:[%s0 + $0x8] sm:$0xff]
      %v302 = vadd.f32 %v300, %v298
      %v303 = vadd.f32 %v301, %v299
      %304 = vst.msk [vmem:[#allocation4] sm:$0xff] %vm96, %v302
      %305 = vst.msk [vmem:[#allocation4 + $0x8] sm:$0xff] %vm96, %v303
    $region37: #{_mlp_forward_2d.1} parent=1 // pred_fallthru
      _
    // Predicated region
    $region38: #{_mlp_forward_2d.1} parent=1 // pred_check
      _
    $region39: #{_mlp_forward_2d.1} parent=1 // pred_check_branch
      %307 = sbr.rel (0) target = $region41
    $region40: #{_mlp_forward_2d.1} parent=1 // pred_region
      %s309 = ssub.s32 256, 256
      %310 = vsyncadd [#allocation5], %s309
      %s311 = sshll.u32 [#allocation4], 4
      %s312 = int_to_ptr.vmem [resolvable:$true] %s311
      %317 = dma.vmem_to_hbm [thread:$0]  %s312, 256, %s7, [#allocation5], 128, 128, 8
    $region41: #{_mlp_forward_2d.1} parent=1 // pred_fallthru
      _
    // Predicated region
    $region42: #{_mlp_forward_2d.1} parent=1 // pred_check
      _
    $region43: #{_mlp_forward_2d.1} parent=1 // pred_check_branch
      %319 = sbr.rel (0) target = $region45
    $region44: #{_mlp_forward_2d.1} parent=1 // pred_region
      %320 = dma.done [#allocation5], 256
    $region45: #{_mlp_forward_2d.1} parent=1 // pred_fallthru
      _
    %321 = vsyncpa [#allocation5], 1

</llo_original>
